<compile_context>
chip_gen: v7x
topology: tpu7x:2x2x1
jax: 0.10.0
libtpu: 0.0.40
codegen_flags: <defaults>
</compile_context>

<pallas_src>
import jax
import jax.numpy as jnp
from jax import lax
from jax.experimental import pallas as pl
from jax.experimental.pallas import tpu as pltpu

KSIZE = 3  # module default


def _sort2(a, b):
    return jnp.minimum(a, b), jnp.maximum(a, b)


def _median9(vals):
    """Exact elementwise median of 9 arrays via the 19-comparator Paeth network.

    Pure min/max -> VPU elementwise ops.  Exact for an odd element count, so it
    matches torch.median(dim=-1)[0] / jnp.median bit-for-bit.
    """
    p = list(vals)
    assert len(p) == 9
    p[1], p[2] = _sort2(p[1], p[2]); p[4], p[5] = _sort2(p[4], p[5]); p[7], p[8] = _sort2(p[7], p[8])
    p[0], p[1] = _sort2(p[0], p[1]); p[3], p[4] = _sort2(p[3], p[4]); p[6], p[7] = _sort2(p[6], p[7])
    p[1], p[2] = _sort2(p[1], p[2]); p[4], p[5] = _sort2(p[4], p[5]); p[7], p[8] = _sort2(p[7], p[8])
    p[0], p[3] = _sort2(p[0], p[3]); p[5], p[8] = _sort2(p[5], p[8]); p[4], p[7] = _sort2(p[4], p[7])
    p[3], p[6] = _sort2(p[3], p[6]); p[1], p[4] = _sort2(p[1], p[4]); p[2], p[5] = _sort2(p[2], p[5])
    p[4], p[7] = _sort2(p[4], p[7]); p[4], p[2] = _sort2(p[4], p[2]); p[6], p[4] = _sort2(p[6], p[4])
    p[4], p[2] = _sort2(p[4], p[2])
    return p[4]


def _emit_mad_tiles(xpad_ref, out_ref, band_rows, W, rs, cs):
    """3x3 median-absolute-deviation for every pixel of one row band.

    xpad_ref : (band_rows + 2, W) row-reflect-padded band (compute dtype)
    out_ref  : (band_rows, W) output block
    rs, cs   : row / column sub-tile sizes (static); cs divides W.
    """
    n_ctiles = W // cs
    odt = out_ref.dtype

    def do_rows(r0, rows):
        # `rows` is always static; `r0` may be a traced loop index.
        for ci in range(n_ctiles):
            c0 = ci * cs
            center = xpad_ref[pl.ds(r0, rows + 2), pl.ds(c0, cs)]
            # dx = -1 value for lane 0 of this tile: reflect at the global left
            # edge, otherwise the last column of the previous tile.
            if c0 == 0:
                lcol = center[:, 1:2]
            else:
                lcol = xpad_ref[pl.ds(r0, rows + 2), pl.ds(c0 - 1, 1)]
            # dx = +1 value for the last lane of this tile.
            if c0 + cs == W:
                rcol = center[:, cs - 2:cs - 1]
            else:
                rcol = xpad_ref[pl.ds(r0, rows + 2), pl.ds(c0 + cs, 1)]
            left = jnp.concatenate([lcol, center[:, :cs - 1]], axis=1)
            right = jnp.concatenate([center[:, 1:], rcol], axis=1)
            wins = [nb[dy:dy + rows, :]
                    for dy in range(KSIZE) for nb in (left, center, right)]
            med = _median9(wins)                               # 3x3 median
            mad = _median9([jnp.abs(w - med) for w in wins])   # median abs dev
            out_ref[pl.ds(r0, rows), pl.ds(c0, cs)] = mad.astype(odt)

    n_rfull, r_tail = divmod(band_rows, rs)
    if n_rfull == 1:
        do_rows(0, rs)
    elif n_rfull > 1:
        def body(t, carry):
            r0 = t * rs
            if rs % 8 == 0:
                r0 = pl.multiple_of(r0, 8)
            do_rows(r0, rs)
            return carry
        lax.fori_loop(0, n_rfull, body, 0, unroll=(n_rfull * n_ctiles <= 16))
    if r_tail:
        do_rows(n_rfull * rs, r_tail)


def _build_band_kernel(band_rows, W, rs, cs, cdt):
    """Band-grid kernel: refs = (top_halo (8,W), band (band_rows,W),
    bottom_halo (8,W), out (band_rows,W), xpad scratch (band_rows+2,W))."""

    def kernel(htop_ref, band_ref, hbot_ref, out_ref, xpad_ref):
        j = pl.program_id(1)
        last = pl.num_programs(1) - 1
        # Reflected / neighbouring rows above and below this band.
        top = jnp.where(j == 0, htop_ref[1:2, :], htop_ref[7:8, :])
        bot = jnp.where(j == last, hbot_ref[6:7, :], hbot_ref[0:1, :])
        # Write the reflected rows directly (no full-band concatenate).
        xpad_ref[pl.ds(1, band_rows), :] = band_ref[...].astype(cdt)
        xpad_ref[pl.ds(0, 1), :] = top.astype(cdt)
        xpad_ref[pl.ds(band_rows + 1, 1), :] = bot.astype(cdt)
        _emit_mad_tiles(xpad_ref, out_ref, band_rows, W, rs, cs)

    return kernel


def _build_single_kernel(H, W, rs, cs, cdt):
    """Whole-image-per-batch fallback (H not a multiple of 8)."""

    def kernel(x_ref, out_ref, xpad_ref):
        xpad_ref[pl.ds(1, H), :] = x_ref[...].astype(cdt)
        xpad_ref[pl.ds(0, 1), :] = x_ref[1:2, :].astype(cdt)
        xpad_ref[pl.ds(H + 1, 1), :] = x_ref[H - 2:H - 1, :].astype(cdt)
        _emit_mad_tiles(xpad_ref, out_ref, H, W, rs, cs)

    return kernel


def _padded_bytes(rows, cols, itemsize):
    return (-(-rows // 8) * 8) * (-(-cols // 128) * 128) * itemsize


def median_absolute_deviation(x, ksize=3, down=False, *, band_rows=None):
    """x: (B, C, H, W). Returns (B, 1, H, W): 3x3 median absolute deviation of
    the center channel with ReflectionPad2d(1) (PyTorch module, down=False)."""
    assert ksize == 3, "kernel is specialized to the module default ksize=3"
    if down:
        # TODO(synk): AvgPool2d(2) / bilinear-Upsample path (down=True) not
        # implemented; the module default is down=False.
        raise NotImplementedError("down=True path not implemented")

    B, C, H, W = x.shape
    assert H >= 2 and W >= 2, "ReflectionPad2d(1) needs H >= 2 and W >= 2"
    cidx = C // 2
    x_dt = jnp.dtype(x.dtype)
    cdt = (jnp.float32
           if (jnp.issubdtype(x_dt, jnp.floating) and x_dt.itemsize < 4)
           else x.dtype)
    isz = x_dt.itemsize
    csz = jnp.dtype(cdt).itemsize

    # Column sub-tile width (must divide W): 128/256-lane tiles keep every live
    # array of the two median networks at <= 2 vregs.
    if W <= 256 or W % 128 != 0:
        # TODO(synk): wide W that is not a multiple of 128 runs as one column
        # tile (may spill vregs); narrow W (<128) leaves lanes under-utilized
        # (could fold rows into the lane axis for lane-dense stores).
        cs = W
    else:
        cs = 256 if W % 256 == 0 else 128
    rs = 8 if H >= 8 else H  # row sub-tile height

    if H % 8 == 0:
        # ---------------- band-grid path ----------------
        if band_rows is None:
            # Largest multiple-of-8 divisor of H giving a roughly <=512 KiB band.
            target = max(8, min(H, ((512 * 1024) // max(W * isz, 1)) // 8 * 8))
            band_rows = 8
            d = 8
            while d <= min(H, target):
                if H % d == 0:
                    band_rows = d
                d += 8
        assert band_rows % 8 == 0 and H % band_rows == 0
        n_bands = H // band_rows
        nb8 = band_rows // 8
        hb8 = H // 8

        kernel = _build_band_kernel(band_rows, W, rs, cs, cdt)

        band_spec = pl.BlockSpec((None, None, band_rows, W),
                                 lambda b, j: (b, cidx, j, 0))
        # 8-row halo blocks; the kernel picks the (possibly reflected) row.
        top_spec = pl.BlockSpec(
            (None, None, 8, W),
            lambda b, j: (b, cidx, jnp.maximum(j * nb8 - 1, 0), 0))
        bot_spec = pl.BlockSpec(
            (None, None, 8, W),
            lambda b, j: (b, cidx, jnp.minimum((j + 1) * nb8, hb8 - 1), 0))
        out_spec = pl.BlockSpec((None, None, band_rows, W),
                                lambda b, j: (b, 0, j, 0))

        band_b = _padded_bytes(band_rows, W, isz)
        halo_b = _padded_bytes(8, W, isz)
        need = (2 * (band_b + 2 * halo_b)                    # double-buffered inputs
                + 2 * band_b                                 # double-buffered output
                + _padded_bytes(band_rows + 2, W, csz)       # scratch
                + 24 * _padded_bytes(rs + 2, cs, csz))       # live sub-tile temps
        vmem_limit = int(min(max(2 * need + (4 << 20), 24 << 20), 48 << 20))
        vmem_limit = max(vmem_limit, need + (2 << 20))

        return pl.pallas_call(
            kernel,
            out_shape=jax.ShapeDtypeStruct((B, 1, H, W), x.dtype),
            grid=(B, n_bands),
            in_specs=[top_spec, band_spec, bot_spec],
            out_specs=out_spec,
            scratch_shapes=[pltpu.VMEM((band_rows + 2, W), cdt)],
            compiler_params=pltpu.CompilerParams(
                dimension_semantics=("parallel", "parallel"),
                vmem_limit_bytes=vmem_limit,
            ),
        )(x, x, x)   # same array three times: band + the two halo views

    # ---------------- whole-image fallback (H % 8 != 0) ----------------
    kernel = _build_single_kernel(H, W, rs, cs, cdt)
    need = (4 * _padded_bytes(H, W, isz)
            + _padded_bytes(H + 2, W, csz)
            + 24 * _padded_bytes(rs + 2, cs, csz))
    try:
        cap = int(pltpu.get_tpu_info().vmem_capacity_bytes)
    except Exception:
        cap = 64 << 20
    vmem_limit = int(min(max(need + (8 << 20), 32 << 20), int(cap * 0.9)))
    return pl.pallas_call(
        kernel,
        out_shape=jax.ShapeDtypeStruct((B, 1, H, W), x.dtype),
        grid=(B,),
        in_specs=[pl.BlockSpec((None, None, H, W), lambda b: (b, cidx, 0, 0))],
        out_specs=pl.BlockSpec((None, None, H, W), lambda b: (b, 0, 0, 0)),
        scratch_shapes=[pltpu.VMEM((H + 2, W), cdt)],
        compiler_params=pltpu.CompilerParams(
            dimension_semantics=("parallel",),
            vmem_limit_bytes=vmem_limit,
        ),
    )(x)


def _mad_reference(x, ksize=3):
    """Pure-JAX reference mirroring the PyTorch forward (down=False)."""
    B, C, H, W = x.shape
    pad = ksize // 2
    center = x[:, C // 2]
    xp = jnp.pad(center, ((0, 0), (pad, pad), (pad, pad)), mode="reflect")
    wins = jnp.stack(
        [xp[:, dy:dy + H, dx:dx + W] for dy in range(ksize) for dx in range(ksize)],
        axis=-1,
    )
    med = jnp.median(wins, axis=-1)
    mad = jnp.median(jnp.abs(wins - med[..., None]), axis=-1)
    return mad[:, None]


if __name__ == "__main__":
    key = jax.random.PRNGKey(0)
    k1, k2, k3 = jax.random.split(key, 3)

    # Primary check: module-like small input (single band per batch element).
    B, C, H, W = 2, 4, 16, 16
    x = jax.random.normal(k1, (B, C, H, W), dtype=jnp.float32)
    out = jax.block_until_ready(median_absolute_deviation(x))
    ref = _mad_reference(x)
    assert out.shape == (B, 1, H, W), out.shape
    assert jnp.allclose(out, ref, atol=1e-6, rtol=1e-6), "mismatch (band path)"

    # Multi-band halo path (forced 8-row bands -> 4 bands with halos).
    x2 = jax.random.normal(k2, (1, 3, 32, 16), dtype=jnp.float32)
    out2 = jax.block_until_ready(median_absolute_deviation(x2, band_rows=8))
    ref2 = _mad_reference(x2)
    assert jnp.allclose(out2, ref2, atol=1e-6, rtol=1e-6), "mismatch (multi-band path)"

    # Whole-image fallback path (H not a multiple of 8) with a row tail.
    x3 = jax.random.normal(k3, (1, 4, 18, 16), dtype=jnp.float32)
    out3 = jax.block_until_ready(median_absolute_deviation(x3))
    ref3 = _mad_reference(x3)
    assert jnp.allclose(out3, ref3, atol=1e-6, rtol=1e-6), "mismatch (fallback path)"

    print("KERNEL_OK")
</pallas_src>

<mosaic_0001>
module attributes {stable_mosaic.version = 11 : i64} {
  func.func @kernel(%arg0: i32, %arg1: i32, %arg2: memref<1x1x8x16xf32, #tpu.memory_space<vmem>>, %arg3: memref<1x1x16x16xf32, #tpu.memory_space<vmem>>, %arg4: memref<1x1x8x16xf32, #tpu.memory_space<vmem>>, %arg5: memref<1x1x16x16xf32, #tpu.memory_space<vmem>>, %arg6: memref<18x16xf32, #tpu.memory_space<vmem>>) attributes {dimension_semantics = [#tpu.dimension_semantics<parallel>, #tpu.dimension_semantics<parallel>], iteration_bounds = array<i64: 2, 1>, scalar_prefetch = 0 : i64, scratch_operands = 1 : i64, tpu.core_type = #tpu.core_type<tc>, window_params = [{transform_indices = @transform_0, window_bounds = array<i64: 1, 1, 8, 16>}, {transform_indices = @transform_1, window_bounds = array<i64: 1, 1, 16, 16>}, {transform_indices = @transform_2, window_bounds = array<i64: 1, 1, 8, 16>}, {transform_indices = @transform_3, window_bounds = array<i64: 1, 1, 16, 16>}]} {
    %c0_i32 = arith.constant 0 : i32
    %0 = arith.cmpi eq, %arg1, %c0_i32 : i32
    %c0 = arith.constant 0 : index
    %c0_0 = arith.constant 0 : index
    %c1 = arith.constant 1 : index
    %c0_1 = arith.constant 0 : index
    %1 = vector.load %arg2[%c0, %c0_0, %c1, %c0_1] : memref<1x1x8x16xf32, #tpu.memory_space<vmem>>, vector<1x1x1x16xf32>
    %2 = vector.shape_cast %1 : vector<1x1x1x16xf32> to vector<1x16xf32>
    %c0_2 = arith.constant 0 : index
    %c0_3 = arith.constant 0 : index
    %c7 = arith.constant 7 : index
    %c0_4 = arith.constant 0 : index
    %3 = vector.load %arg2[%c0_2, %c0_3, %c7, %c0_4] : memref<1x1x8x16xf32, #tpu.memory_space<vmem>>, vector<1x1x1x16xf32>
    %4 = vector.shape_cast %3 : vector<1x1x1x16xf32> to vector<1x16xf32>
    %5 = arith.select %0, %2, %4 : vector<1x16xf32>
    %c0_i32_5 = arith.constant 0 : i32
    %6 = arith.cmpi eq, %arg1, %c0_i32_5 : i32
    %c0_6 = arith.constant 0 : index
    %c0_7 = arith.constant 0 : index
    %c6 = arith.constant 6 : index
    %c0_8 = arith.constant 0 : index
    %7 = vector.load %arg4[%c0_6, %c0_7, %c6, %c0_8] : memref<1x1x8x16xf32, #tpu.memory_space<vmem>>, vector<1x1x1x16xf32>
    %8 = vector.shape_cast %7 : vector<1x1x1x16xf32> to vector<1x16xf32>
    %c0_9 = arith.constant 0 : index
    %c0_10 = arith.constant 0 : index
    %c0_11 = arith.constant 0 : index
    %c0_12 = arith.constant 0 : index
    %9 = vector.load %arg4[%c0_9, %c0_10, %c0_11, %c0_12] : memref<1x1x8x16xf32, #tpu.memory_space<vmem>>, vector<1x1x1x16xf32>
    %10 = vector.shape_cast %9 : vector<1x1x1x16xf32> to vector<1x16xf32>
    %11 = arith.select %6, %8, %10 : vector<1x16xf32>
    %c0_13 = arith.constant 0 : index
    %c0_14 = arith.constant 0 : index
    %c0_15 = arith.constant 0 : index
    %c0_16 = arith.constant 0 : index
    %12 = vector.load %arg3[%c0_13, %c0_14, %c0_15, %c0_16] : memref<1x1x16x16xf32, #tpu.memory_space<vmem>>, vector<1x1x16x16xf32>
    %13 = vector.shape_cast %12 : vector<1x1x16x16xf32> to vector<16x16xf32>
    %c1_17 = arith.constant 1 : index
    %c0_18 = arith.constant 0 : index
    %14 = vector.load %arg6[%c1_17, %c0_18] : memref<18x16xf32, #tpu.memory_space<vmem>>, vector<16x16xf32>
    tpu.vector_store %arg6[%c1_17, %c0_18], %13 {strides = array<i32>} : memref<18x16xf32, #tpu.memory_space<vmem>>, vector<16x16xf32>,
    %c0_19 = arith.constant 0 : index
    %c0_20 = arith.constant 0 : index
    %15 = vector.load %arg6[%c0_19, %c0_20] : memref<18x16xf32, #tpu.memory_space<vmem>>, vector<1x16xf32>
    tpu.vector_store %arg6[%c0_19, %c0_20], %5 {strides = array<i32>} : memref<18x16xf32, #tpu.memory_space<vmem>>, vector<1x16xf32>,
    %c17 = arith.constant 17 : index
    %c0_21 = arith.constant 0 : index
    %16 = vector.load %arg6[%c17, %c0_21] : memref<18x16xf32, #tpu.memory_space<vmem>>, vector<1x16xf32>
    tpu.vector_store %arg6[%c17, %c0_21], %11 {strides = array<i32>} : memref<18x16xf32, #tpu.memory_space<vmem>>, vector<1x16xf32>,
    %c0_i32_22 = arith.constant 0 : i32
    %c8_i32 = arith.constant 8 : i32
    %17 = arith.muli %c0_i32_22, %c8_i32 : i32
    %18 = tpu.assume_multiple %17, 8 : i32
    %19 = arith.index_cast %18 : i32 to index
    %c0_23 = arith.constant 0 : index
    %20 = vector.load %arg6[%19, %c0_23] : memref<18x16xf32, #tpu.memory_space<vmem>>, vector<10x16xf32>
    %21 = vector.extract_strided_slice %20 {offsets = [0, 1], sizes = [10, 1], strides = [1, 1]} : vector<10x16xf32> to vector<10x1xf32>
    %22 = vector.extract_strided_slice %20 {offsets = [0, 14], sizes = [10, 1], strides = [1, 1]} : vector<10x16xf32> to vector<10x1xf32>
    %23 = vector.extract_strided_slice %20 {offsets = [0, 0], sizes = [10, 15], strides = [1, 1]} : vector<10x16xf32> to vector<10x15xf32>
    %24 = tpu.concatenate %21, %23 in 1 : vector<10x1xf32>, vector<10x15xf32> -> vector<10x16xf32>
    %25 = vector.extract_strided_slice %20 {offsets = [0, 1], sizes = [10, 15], strides = [1, 1]} : vector<10x16xf32> to vector<10x15xf32>
    %26 = tpu.concatenate %25, %22 in 1 : vector<10x15xf32>, vector<10x1xf32> -> vector<10x16xf32>
    %27 = vector.extract_strided_slice %24 {offsets = [0, 0], sizes = [8, 16], strides = [1, 1]} : vector<10x16xf32> to vector<8x16xf32>
    %28 = vector.extract_strided_slice %20 {offsets = [0, 0], sizes = [8, 16], strides = [1, 1]} : vector<10x16xf32> to vector<8x16xf32>
    %29 = vector.extract_strided_slice %26 {offsets = [0, 0], sizes = [8, 16], strides = [1, 1]} : vector<10x16xf32> to vector<8x16xf32>
    %30 = vector.extract_strided_slice %24 {offsets = [1, 0], sizes = [8, 16], strides = [1, 1]} : vector<10x16xf32> to vector<8x16xf32>
    %31 = vector.extract_strided_slice %20 {offsets = [1, 0], sizes = [8, 16], strides = [1, 1]} : vector<10x16xf32> to vector<8x16xf32>
    %32 = vector.extract_strided_slice %26 {offsets = [1, 0], sizes = [8, 16], strides = [1, 1]} : vector<10x16xf32> to vector<8x16xf32>
    %33 = vector.extract_strided_slice %24 {offsets = [2, 0], sizes = [8, 16], strides = [1, 1]} : vector<10x16xf32> to vector<8x16xf32>
    %34 = vector.extract_strided_slice %20 {offsets = [2, 0], sizes = [8, 16], strides = [1, 1]} : vector<10x16xf32> to vector<8x16xf32>
    %35 = vector.extract_strided_slice %26 {offsets = [2, 0], sizes = [8, 16], strides = [1, 1]} : vector<10x16xf32> to vector<8x16xf32>
    %36 = arith.minimumf %28, %29 : vector<8x16xf32>
    %37 = arith.maximumf %28, %29 : vector<8x16xf32>
    %38 = arith.minimumf %31, %32 : vector<8x16xf32>
    %39 = arith.maximumf %31, %32 : vector<8x16xf32>
    %40 = arith.minimumf %34, %35 : vector<8x16xf32>
    %41 = arith.maximumf %34, %35 : vector<8x16xf32>
    %42 = arith.minimumf %27, %36 : vector<8x16xf32>
    %43 = arith.maximumf %27, %36 : vector<8x16xf32>
    %44 = arith.minimumf %30, %38 : vector<8x16xf32>
    %45 = arith.maximumf %30, %38 : vector<8x16xf32>
    %46 = arith.minimumf %33, %40 : vector<8x16xf32>
    %47 = arith.maximumf %33, %40 : vector<8x16xf32>
    %48 = arith.minimumf %43, %37 : vector<8x16xf32>
    %49 = arith.maximumf %43, %37 : vector<8x16xf32>
    %50 = arith.minimumf %45, %39 : vector<8x16xf32>
    %51 = arith.maximumf %45, %39 : vector<8x16xf32>
    %52 = arith.minimumf %47, %41 : vector<8x16xf32>
    %53 = arith.maximumf %47, %41 : vector<8x16xf32>
    %54 = arith.maximumf %42, %44 : vector<8x16xf32>
    %55 = arith.minimumf %51, %53 : vector<8x16xf32>
    %56 = arith.minimumf %50, %52 : vector<8x16xf32>
    %57 = arith.maximumf %50, %52 : vector<8x16xf32>
    %58 = arith.maximumf %54, %46 : vector<8x16xf32>
    %59 = arith.maximumf %48, %56 : vector<8x16xf32>
    %60 = arith.minimumf %49, %55 : vector<8x16xf32>
    %61 = arith.minimumf %59, %57 : vector<8x16xf32>
    %62 = arith.minimumf %61, %60 : vector<8x16xf32>
    %63 = arith.maximumf %61, %60 : vector<8x16xf32>
    %64 = arith.maximumf %58, %62 : vector<8x16xf32>
    %65 = arith.minimumf %64, %63 : vector<8x16xf32>
    %66 = arith.subf %27, %65 : vector<8x16xf32>
    %67 = math.absf %66 : vector<8x16xf32>
    %68 = arith.subf %28, %65 : vector<8x16xf32>
    %69 = math.absf %68 : vector<8x16xf32>
    %70 = arith.subf %29, %65 : vector<8x16xf32>
    %71 = math.absf %70 : vector<8x16xf32>
    %72 = arith.subf %30, %65 : vector<8x16xf32>
    %73 = math.absf %72 : vector<8x16xf32>
    %74 = arith.subf %31, %65 : vector<8x16xf32>
    %75 = math.absf %74 : vector<8x16xf32>
    %76 = arith.subf %32, %65 : vector<8x16xf32>
    %77 = math.absf %76 : vector<8x16xf32>
    %78 = arith.subf %33, %65 : vector<8x16xf32>
    %79 = math.absf %78 : vector<8x16xf32>
    %80 = arith.subf %34, %65 : vector<8x16xf32>
    %81 = math.absf %80 : vector<8x16xf32>
    %82 = arith.subf %35, %65 : vector<8x16xf32>
    %83 = math.absf %82 : vector<8x16xf32>
    %84 = arith.minimumf %69, %71 : vector<8x16xf32>
    %85 = arith.maximumf %69, %71 : vector<8x16xf32>
    %86 = arith.minimumf %75, %77 : vector<8x16xf32>
    %87 = arith.maximumf %75, %77 : vector<8x16xf32>
    %88 = arith.minimumf %81, %83 : vector<8x16xf32>
    %89 = arith.maximumf %81, %83 : vector<8x16xf32>
    %90 = arith.minimumf %67, %84 : vector<8x16xf32>
    %91 = arith.maximumf %67, %84 : vector<8x16xf32>
    %92 = arith.minimumf %73, %86 : vector<8x16xf32>
    %93 = arith.maximumf %73, %86 : vector<8x16xf32>
    %94 = arith.minimumf %79, %88 : vector<8x16xf32>
    %95 = arith.maximumf %79, %88 : vector<8x16xf32>
    %96 = arith.minimumf %91, %85 : vector<8x16xf32>
    %97 = arith.maximumf %91, %85 : vector<8x16xf32>
    %98 = arith.minimumf %93, %87 : vector<8x16xf32>
    %99 = arith.maximumf %93, %87 : vector<8x16xf32>
    %100 = arith.minimumf %95, %89 : vector<8x16xf32>
    %101 = arith.maximumf %95, %89 : vector<8x16xf32>
    %102 = arith.maximumf %90, %92 : vector<8x16xf32>
    %103 = arith.minimumf %99, %101 : vector<8x16xf32>
    %104 = arith.minimumf %98, %100 : vector<8x16xf32>
    %105 = arith.maximumf %98, %100 : vector<8x16xf32>
    %106 = arith.maximumf %102, %94 : vector<8x16xf32>
    %107 = arith.maximumf %96, %104 : vector<8x16xf32>
    %108 = arith.minimumf %97, %103 : vector<8x16xf32>
    %109 = arith.minimumf %107, %105 : vector<8x16xf32>
    %110 = arith.minimumf %109, %108 : vector<8x16xf32>
    %111 = arith.maximumf %109, %108 : vector<8x16xf32>
    %112 = arith.maximumf %106, %110 : vector<8x16xf32>
    %113 = arith.minimumf %112, %111 : vector<8x16xf32>
    %c0_24 = arith.constant 0 : index
    %c0_25 = arith.constant 0 : index
    %114 = arith.index_cast %18 : i32 to index
    %c0_26 = arith.constant 0 : index
    %115 = vector.load %arg5[%c0_24, %c0_25, %114, %c0_26] : memref<1x1x16x16xf32, #tpu.memory_space<vmem>>, vector<1x1x8x16xf32>
    %116 = vector.shape_cast %115 : vector<1x1x8x16xf32> to vector<8x16xf32>
    %117 = vector.shape_cast %113 : vector<8x16xf32> to vector<1x1x8x16xf32>
    tpu.vector_store %arg5[%c0_24, %c0_25, %114, %c0_26], %117 {strides = array<i32>} : memref<1x1x16x16xf32, #tpu.memory_space<vmem>>, vector<1x1x8x16xf32>,
    %c1_i32 = arith.constant 1 : i32
    %c8_i32_27 = arith.constant 8 : i32
    %118 = arith.muli %c1_i32, %c8_i32_27 : i32
    %119 = tpu.assume_multiple %118, 8 : i32
    %120 = arith.index_cast %119 : i32 to index
    %c0_28 = arith.constant 0 : index
    %121 = vector.load %arg6[%120, %c0_28] : memref<18x16xf32, #tpu.memory_space<vmem>>, vector<10x16xf32>
    %122 = vector.extract_strided_slice %121 {offsets = [0, 1], sizes = [10, 1], strides = [1, 1]} : vector<10x16xf32> to vector<10x1xf32>
    %123 = vector.extract_strided_slice %121 {offsets = [0, 14], sizes = [10, 1], strides = [1, 1]} : vector<10x16xf32> to vector<10x1xf32>
    %124 = vector.extract_strided_slice %121 {offsets = [0, 0], sizes = [10, 15], strides = [1, 1]} : vector<10x16xf32> to vector<10x15xf32>
    %125 = tpu.concatenate %122, %124 in 1 : vector<10x1xf32>, vector<10x15xf32> -> vector<10x16xf32>
    %126 = vector.extract_strided_slice %121 {offsets = [0, 1], sizes = [10, 15], strides = [1, 1]} : vector<10x16xf32> to vector<10x15xf32>
    %127 = tpu.concatenate %126, %123 in 1 : vector<10x15xf32>, vector<10x1xf32> -> vector<10x16xf32>
    %128 = vector.extract_strided_slice %125 {offsets = [0, 0], sizes = [8, 16], strides = [1, 1]} : vector<10x16xf32> to vector<8x16xf32>
    %129 = vector.extract_strided_slice %121 {offsets = [0, 0], sizes = [8, 16], strides = [1, 1]} : vector<10x16xf32> to vector<8x16xf32>
    %130 = vector.extract_strided_slice %127 {offsets = [0, 0], sizes = [8, 16], strides = [1, 1]} : vector<10x16xf32> to vector<8x16xf32>
    %131 = vector.extract_strided_slice %125 {offsets = [1, 0], sizes = [8, 16], strides = [1, 1]} : vector<10x16xf32> to vector<8x16xf32>
    %132 = vector.extract_strided_slice %121 {offsets = [1, 0], sizes = [8, 16], strides = [1, 1]} : vector<10x16xf32> to vector<8x16xf32>
    %133 = vector.extract_strided_slice %127 {offsets = [1, 0], sizes = [8, 16], strides = [1, 1]} : vector<10x16xf32> to vector<8x16xf32>
    %134 = vector.extract_strided_slice %125 {offsets = [2, 0], sizes = [8, 16], strides = [1, 1]} : vector<10x16xf32> to vector<8x16xf32>
    %135 = vector.extract_strided_slice %121 {offsets = [2, 0], sizes = [8, 16], strides = [1, 1]} : vector<10x16xf32> to vector<8x16xf32>
    %136 = vector.extract_strided_slice %127 {offsets = [2, 0], sizes = [8, 16], strides = [1, 1]} : vector<10x16xf32> to vector<8x16xf32>
    %137 = arith.minimumf %129, %130 : vector<8x16xf32>
    %138 = arith.maximumf %129, %130 : vector<8x16xf32>
    %139 = arith.minimumf %132, %133 : vector<8x16xf32>
    %140 = arith.maximumf %132, %133 : vector<8x16xf32>
    %141 = arith.minimumf %135, %136 : vector<8x16xf32>
    %142 = arith.maximumf %135, %136 : vector<8x16xf32>
    %143 = arith.minimumf %128, %137 : vector<8x16xf32>
    %144 = arith.maximumf %128, %137 : vector<8x16xf32>
    %145 = arith.minimumf %131, %139 : vector<8x16xf32>
    %146 = arith.maximumf %131, %139 : vector<8x16xf32>
    %147 = arith.minimumf %134, %141 : vector<8x16xf32>
    %148 = arith.maximumf %134, %141 : vector<8x16xf32>
    %149 = arith.minimumf %144, %138 : vector<8x16xf32>
    %150 = arith.maximumf %144, %138 : vector<8x16xf32>
    %151 = arith.minimumf %146, %140 : vector<8x16xf32>
    %152 = arith.maximumf %146, %140 : vector<8x16xf32>
    %153 = arith.minimumf %148, %142 : vector<8x16xf32>
    %154 = arith.maximumf %148, %142 : vector<8x16xf32>
    %155 = arith.maximumf %143, %145 : vector<8x16xf32>
    %156 = arith.minimumf %152, %154 : vector<8x16xf32>
    %157 = arith.minimumf %151, %153 : vector<8x16xf32>
    %158 = arith.maximumf %151, %153 : vector<8x16xf32>
    %159 = arith.maximumf %155, %147 : vector<8x16xf32>
    %160 = arith.maximumf %149, %157 : vector<8x16xf32>
    %161 = arith.minimumf %150, %156 : vector<8x16xf32>
    %162 = arith.minimumf %160, %158 : vector<8x16xf32>
    %163 = arith.minimumf %162, %161 : vector<8x16xf32>
    %164 = arith.maximumf %162, %161 : vector<8x16xf32>
    %165 = arith.maximumf %159, %163 : vector<8x16xf32>
    %166 = arith.minimumf %165, %164 : vector<8x16xf32>
    %167 = arith.subf %128, %166 : vector<8x16xf32>
    %168 = math.absf %167 : vector<8x16xf32>
    %169 = arith.subf %129, %166 : vector<8x16xf32>
    %170 = math.absf %169 : vector<8x16xf32>
    %171 = arith.subf %130, %166 : vector<8x16xf32>
    %172 = math.absf %171 : vector<8x16xf32>
    %173 = arith.subf %131, %166 : vector<8x16xf32>
    %174 = math.absf %173 : vector<8x16xf32>
    %175 = arith.subf %132, %166 : vector<8x16xf32>
    %176 = math.absf %175 : vector<8x16xf32>
    %177 = arith.subf %133, %166 : vector<8x16xf32>
    %178 = math.absf %177 : vector<8x16xf32>
    %179 = arith.subf %134, %166 : vector<8x16xf32>
    %180 = math.absf %179 : vector<8x16xf32>
    %181 = arith.subf %135, %166 : vector<8x16xf32>
    %182 = math.absf %181 : vector<8x16xf32>
    %183 = arith.subf %136, %166 : vector<8x16xf32>
    %184 = math.absf %183 : vector<8x16xf32>
    %185 = arith.minimumf %170, %172 : vector<8x16xf32>
    %186 = arith.maximumf %170, %172 : vector<8x16xf32>
    %187 = arith.minimumf %176, %178 : vector<8x16xf32>
    %188 = arith.maximumf %176, %178 : vector<8x16xf32>
    %189 = arith.minimumf %182, %184 : vector<8x16xf32>
    %190 = arith.maximumf %182, %184 : vector<8x16xf32>
    %191 = arith.minimumf %168, %185 : vector<8x16xf32>
    %192 = arith.maximumf %168, %185 : vector<8x16xf32>
    %193 = arith.minimumf %174, %187 : vector<8x16xf32>
    %194 = arith.maximumf %174, %187 : vector<8x16xf32>
    %195 = arith.minimumf %180, %189 : vector<8x16xf32>
    %196 = arith.maximumf %180, %189 : vector<8x16xf32>
    %197 = arith.minimumf %192, %186 : vector<8x16xf32>
    %198 = arith.maximumf %192, %186 : vector<8x16xf32>
    %199 = arith.minimumf %194, %188 : vector<8x16xf32>
    %200 = arith.maximumf %194, %188 : vector<8x16xf32>
    %201 = arith.minimumf %196, %190 : vector<8x16xf32>
    %202 = arith.maximumf %196, %190 : vector<8x16xf32>
    %203 = arith.maximumf %191, %193 : vector<8x16xf32>
    %204 = arith.minimumf %200, %202 : vector<8x16xf32>
    %205 = arith.minimumf %199, %201 : vector<8x16xf32>
    %206 = arith.maximumf %199, %201 : vector<8x16xf32>
    %207 = arith.maximumf %203, %195 : vector<8x16xf32>
    %208 = arith.maximumf %197, %205 : vector<8x16xf32>
    %209 = arith.minimumf %198, %204 : vector<8x16xf32>
    %210 = arith.minimumf %208, %206 : vector<8x16xf32>
    %211 = arith.minimumf %210, %209 : vector<8x16xf32>
    %212 = arith.maximumf %210, %209 : vector<8x16xf32>
    %213 = arith.maximumf %207, %211 : vector<8x16xf32>
    %214 = arith.minimumf %213, %212 : vector<8x16xf32>
    %c0_29 = arith.constant 0 : index
    %c0_30 = arith.constant 0 : index
    %215 = arith.index_cast %119 : i32 to index
    %c0_31 = arith.constant 0 : index
    %216 = vector.load %arg5[%c0_29, %c0_30, %215, %c0_31] : memref<1x1x16x16xf32, #tpu.memory_space<vmem>>, vector<1x1x8x16xf32>
    %217 = vector.shape_cast %216 : vector<1x1x8x16xf32> to vector<8x16xf32>
    %218 = vector.shape_cast %214 : vector<8x16xf32> to vector<1x1x8x16xf32>
    tpu.vector_store %arg5[%c0_29, %c0_30, %215, %c0_31], %218 {strides = array<i32>} : memref<1x1x16x16xf32, #tpu.memory_space<vmem>>, vector<1x1x8x16xf32>,
    %c2_i32 = arith.constant 2 : i32
    return
  }
  func.func @transform_0(%arg0: i32, %arg1: i32) -> (i32, i32, i32, i32) {
    %c2_i32 = arith.constant 2 : i32
    %0 = arith.muli %arg1, %c2_i32 : i32
    %c1_i32 = arith.constant 1 : i32
    %1 = arith.subi %0, %c1_i32 : i32
    %c0_i32 = arith.constant 0 : i32
    %2 = arith.maxsi %1, %c0_i32 : i32
    %c2_i32_0 = arith.constant 2 : i32
    %c0_i32_1 = arith.constant 0 : i32
    %c0_i32_2 = arith.constant 0 : i32
    return %arg0, %c2_i32_0, %2, %c0_i32_1 : i32, i32, i32, i32
  }
  func.func @transform_1(%arg0: i32, %arg1: i32) -> (i32, i32, i32, i32) {
    %c2_i32 = arith.constant 2 : i32
    %c0_i32 = arith.constant 0 : i32
    %c0_i32_0 = arith.constant 0 : i32
    return %arg0, %c2_i32, %arg1, %c0_i32 : i32, i32, i32, i32
  }
  func.func @transform_2(%arg0: i32, %arg1: i32) -> (i32, i32, i32, i32) {
    %c1_i32 = arith.constant 1 : i32
    %0 = arith.addi %arg1, %c1_i32 : i32
    %c2_i32 = arith.constant 2 : i32
    %1 = arith.muli %0, %c2_i32 : i32
    %c1_i32_0 = arith.constant 1 : i32
    %2 = arith.minsi %1, %c1_i32_0 : i32
    %c2_i32_1 = arith.constant 2 : i32
    %c0_i32 = arith.constant 0 : i32
    %c0_i32_2 = arith.constant 0 : i32
    return %arg0, %c2_i32_1, %2, %c0_i32 : i32, i32, i32, i32
  }
  func.func @transform_3(%arg0: i32, %arg1: i32) -> (i32, i32, i32, i32) {
    %c0_i32 = arith.constant 0 : i32
    %c0_i32_0 = arith.constant 0 : i32
    %c0_i32_1 = arith.constant 0 : i32
    return %arg0, %c0_i32, %arg1, %c0_i32_0 : i32, i32, i32, i32
  }
}

</mosaic_0001>

<llo_original>
// kernel: tpu_custom_call.1
$region0: #{tpu_custom_call.1}
  #allocation0 [shape = 'u32[]', space=smem, size = 0x4, offset = 0x4, fixed_abs, tag = 'smem constant byte address 0x4 - core index']
  #allocation1 [shape = 'u32[144,128]{1,0:T(1,128)}', space=vmem, size = 0x12000, scoped, tag = 'internal scratch']
  #allocation2 [shape = 'f32[18,16]{1,0:T(8,128)}', space=vmem, size = 0x3000, scoped, tag = 'scratch operand']
  %s0 = inlined_call_operand.hbm [shape: f32[2,4,16,16], index: 0, kind: input, shape index: {}]
  %s1 = inlined_call_operand.hbm [shape: f32[2,4,16,16], index: 1, kind: input, shape index: {}]
  %s2 = inlined_call_operand.hbm [shape: f32[2,4,16,16], index: 2, kind: input, shape index: {}]
  %s3 = inlined_call_operand.hbm [shape: f32[2,1,16,16], index: 3, kind: output, shape index: {}]
  %s4 = sld [smem:[#allocation0]]
  $region57: #{tpu_custom_call.1} parent=0
    _
  %s6 = ssub.s32 1, %s4
  %s7 = scalar_select 0, %s6, %s4
  $region1: #{tpu_custom_call.1} parent=0
    #allocation3 [shape = 'u8[8192]{0}', space=vmem, size = 0x2000, scoped, tag = 'input window, operand 0']
    #allocation4 [shape = 's32[2]{0}', space=sflag, size = 0x8, scoped, tag = 'scoped memory for tpu_custom_call.1']
    #allocation5 [shape = 's32[2]{0}', space=sflag, size = 0x8, scoped, tag = 'scoped memory for tpu_custom_call.1']
    #allocation6 [shape = 'u8[16384]{0}', space=vmem, size = 0x4000, scoped, tag = 'input window, operand 1']
    #allocation7 [shape = 's32[2]{0}', space=sflag, size = 0x8, scoped, tag = 'scoped memory for tpu_custom_call.1']
    #allocation8 [shape = 'u8[8192]{0}', space=vmem, size = 0x2000, scoped, tag = 'input window, operand 2']
    #allocation9 [shape = 'u8[16384]{0}', space=vmem, size = 0x4000, scoped, tag = 'output window, operand 0']
    %8 = vsyncpa [#allocation4], 0
    %s9 = scalar_lea.sflag [#allocation4], 1
    %10 = vsyncpa %s9, 0
    %11 = vsyncpa [#allocation7], 0
    %s12 = scalar_lea.sflag [#allocation7], 1
    %13 = vsyncpa %s12, 0
    %14 = vsyncpa [#allocation5], 0
    %s15 = scalar_lea.sflag [#allocation5], 1
    %16 = vsyncpa %s15, 0
    loop: start=0, step=1, limit=4
    $region2: #{tpu_custom_call.1} parent=1 // loop_pre_header
      _
    $region3: #{tpu_custom_call.1} parent=1 // loop_header
      %s18 = sphi 0, %s22
      %p19 = scmp.ge.s32.totalorder %s18, 4
      %s25 = sphi 0, %s37
      %s26 = sphi 0, %s33
      %s27 = sphi 0, %s25
      %s28 = sphi 0, %s26
      %s29 = sphi 0, %s27
      %s30 = sphi 0, %s28
      %s50 = sphi 0, %s52
      %s53 = sphi 0, %s50
      %s54 = sphi 0, %s53
      %s70 = sphi 0, %s54
      %s78 = sphi 0, %s80
      %s81 = sphi 0, %s78
      %s82 = sphi 0, %s81
      %s98 = sphi 0, %s82
      %s114 = sphi 0, %s116
      %s117 = sphi 0, %s114
      %s118 = sphi 0, %s117
      %s134 = sphi 0, %s118
      %s142 = sphi 0, %s144
      %s145 = sphi 0, %s142
      %s146 = sphi 0, %s145
      %s162 = sphi 0, %s146
    $region4: #{tpu_custom_call.1} parent=1 // loop_header_branch
      %21 = sbr.rel (%p19) target = $region8
    $region5: #{tpu_custom_call.1} parent=1 // loop_body
      %s23 = ssub.s32 %s18, 1
      %s24 = ssub.s32 %s18, 2
      %s31 = sadd.s32 1, %s26
      %p32 = scmp.ge.s32.totalorder %s31, 1
      %s33 = scalar_select %p32, 0, %s31
      %s34 = sadd.s32 1, %s25
      %s35 = scalar_select %p32, %s34, %s25
      %p36 = scmp.ge.s32.totalorder %s35, 2
      %s37 = scalar_select %p36, 0, %s35
      %s38 = smul.u32 %s26, 2
      %s39 = ssub.s32 %s38, 1
      %p40 = scmp.gt.s32.totalorder %s39, 0
      %s41 = scalar_select %p40, %s39, 0
      %s42 = smul.u32 %s33, 2
      %s43 = ssub.s32 %s42, 1
      %p44 = scmp.gt.s32.totalorder %s43, 0
      %s45 = scalar_select %p44, %s43, 0
      %s46 = ssub.s32 %s25, %s37
      %s47 = ssub.s32 %s41, %s45
      %s48 = sor.u32 %s46, %s47
      %p49 = scmp.eq.s32.totalorder %s48, 0
      %s51 = sadd.s32 %s50, 1
      %s52 = scalar_select %p49, %s50, %s51
      %p55 = pneg %p49
      %p56 = scmp.eq.s32.totalorder %s18, 1
      %p57 = por %p55, %p56
      %p58 = scmp.ne.s32.totalorder %s50, %s53
      %p59 = scmp.eq.s32.totalorder %s18, 0
      %p60 = por %p58, %p59
      %p61 = scmp.ne.s32.totalorder %s50, %s53
      %p62 = scmp.eq.s32.totalorder %s23, 1
      %p63 = por %p61, %p62
      %p64 = scmp.ne.s32.totalorder %s53, %s54
      %p65 = scmp.eq.s32.totalorder %s23, 0
      %p66 = por %p64, %p65
      %p67 = scmp.ne.s32.totalorder %s53, %s54
      %p68 = scmp.eq.s32.totalorder %s24, 1
      %p69 = por %p67, %p68
      %p71 = scmp.ne.s32.totalorder %s54, %s70
      %p72 = scmp.eq.s32.totalorder %s24, 0
      %p73 = por %p71, %p72
      %s74 = ssub.s32 %s25, %s37
      %s75 = ssub.s32 %s26, %s33
      %s76 = sor.u32 %s74, %s75
      %p77 = scmp.eq.s32.totalorder %s76, 0
      %s79 = sadd.s32 %s78, 1
      %s80 = scalar_select %p77, %s78, %s79
      %p83 = pneg %p77
      %p84 = scmp.eq.s32.totalorder %s18, 1
      %p85 = por %p83, %p84
      %p86 = scmp.ne.s32.totalorder %s78, %s81
      %p87 = scmp.eq.s32.totalorder %s18, 0
      %p88 = por %p86, %p87
      %p89 = scmp.ne.s32.totalorder %s78, %s81
      %p90 = scmp.eq.s32.totalorder %s23, 1
      %p91 = por %p89, %p90
      %p92 = scmp.ne.s32.totalorder %s81, %s82
      %p93 = scmp.eq.s32.totalorder %s23, 0
      %p94 = por %p92, %p93
      %p95 = scmp.ne.s32.totalorder %s81, %s82
      %p96 = scmp.eq.s32.totalorder %s24, 1
      %p97 = por %p95, %p96
      %p99 = scmp.ne.s32.totalorder %s82, %s98
      %p100 = scmp.eq.s32.totalorder %s24, 0
      %p101 = por %p99, %p100
      %s102 = sadd.s32 %s26, 1
      %s103 = smul.u32 %s102, 2
      %p104 = scmp.lt.s32.totalorder %s103, 1
      %s105 = scalar_select %p104, %s103, 1
      %s106 = sadd.s32 %s33, 1
      %s107 = smul.u32 %s106, 2
      %p108 = scmp.lt.s32.totalorder %s107, 1
      %s109 = scalar_select %p108, %s107, 1
      %s110 = ssub.s32 %s25, %s37
      %s111 = ssub.s32 %s105, %s109
      %s112 = sor.u32 %s110, %s111
      %p113 = scmp.eq.s32.totalorder %s112, 0
      %s115 = sadd.s32 %s114, 1
      %s116 = scalar_select %p113, %s114, %s115
      %p119 = pneg %p113
      %p120 = scmp.eq.s32.totalorder %s18, 1
      %p121 = por %p119, %p120
      %p122 = scmp.ne.s32.totalorder %s114, %s117
      %p123 = scmp.eq.s32.totalorder %s18, 0
      %p124 = por %p122, %p123
      %p125 = scmp.ne.s32.totalorder %s114, %s117
      %p126 = scmp.eq.s32.totalorder %s23, 1
      %p127 = por %p125, %p126
      %p128 = scmp.ne.s32.totalorder %s117, %s118
      %p129 = scmp.eq.s32.totalorder %s23, 0
      %p130 = por %p128, %p129
      %p131 = scmp.ne.s32.totalorder %s117, %s118
      %p132 = scmp.eq.s32.totalorder %s24, 1
      %p133 = por %p131, %p132
      %p135 = scmp.ne.s32.totalorder %s118, %s134
      %p136 = scmp.eq.s32.totalorder %s24, 0
      %p137 = por %p135, %p136
      %s138 = ssub.s32 %s25, %s37
      %s139 = ssub.s32 %s26, %s33
      %s140 = sor.u32 %s138, %s139
      %p141 = scmp.eq.s32.totalorder %s140, 0
      %s143 = sadd.s32 %s142, 1
      %s144 = scalar_select %p141, %s142, %s143
      %p147 = pneg %p141
      %p148 = scmp.eq.s32.totalorder %s18, 1
      %p149 = por %p147, %p148
      %p150 = scmp.ne.s32.totalorder %s142, %s145
      %p151 = scmp.eq.s32.totalorder %s18, 0
      %p152 = por %p150, %p151
      %p153 = scmp.ne.s32.totalorder %s142, %s145
      %p154 = scmp.eq.s32.totalorder %s23, 1
      %p155 = por %p153, %p154
      %p156 = scmp.ne.s32.totalorder %s145, %s146
      %p157 = scmp.eq.s32.totalorder %s23, 0
      %p158 = por %p156, %p157
      %p159 = scmp.ne.s32.totalorder %s145, %s146
      %p160 = scmp.eq.s32.totalorder %s24, 1
      %p161 = por %p159, %p160
      %p163 = scmp.ne.s32.totalorder %s146, %s162
      %p164 = scmp.eq.s32.totalorder %s24, 0
      %p165 = por %p163, %p164
      %p166 = scmp.le.s32.totalorder 1, %s18
      %p167 = scmp.lt.s32.totalorder %s18, 3
      %p168 = pnand %p166, %p167
      %p169 = pneg %p168
      // Predicated region
      $region9: #{tpu_custom_call.1} parent=5 // pred_check
        _
      $region10: #{tpu_custom_call.1} parent=5 // pred_check_branch
        %171 = sbr.rel (%p168) target = $region12
      $region11: #{tpu_custom_call.1} parent=5 // pred_region
        %s172 = ssub.s32 %s18, 1
      $region12: #{tpu_custom_call.1} parent=5 // pred_fallthru
        _
      %p173 = scmp.lt.s32.totalorder %s18, 2
      // Predicated region
      $region13: #{tpu_custom_call.1} parent=5 // pred_check
        %p174 = pneg %p173
      $region14: #{tpu_custom_call.1} parent=5 // pred_check_branch
        %176 = sbr.rel (%p174) target = $region16
      $region15: #{tpu_custom_call.1} parent=5 // pred_region
        // Predicated region
        $region17: #{tpu_custom_call.1} parent=15 // pred_check
          %p177 = pneg %p60
        $region18: #{tpu_custom_call.1} parent=15 // pred_check_branch
          %179 = sbr.rel (%p177) target = $region20
        $region19: #{tpu_custom_call.1} parent=15 // pred_region
          %s180 = sand.u32 %s50, 1
          %s181 = scalar_lea.sflag [#allocation4], %s180
          %s182 = sand.u32 %s50, 1
          %s183 = smul.addr %s182, 8
          %s184 = scalar_lea.vmem [#allocation3], %s183
          %s185 = smul.u32 %s26, 2
          %s186 = ssub.s32 %s185, 1
          %p187 = scmp.gt.s32.totalorder %s186, 0
          %s188 = scalar_select %p187, %s186, 0
          %s190 = ssub.s32 128, 128
          %191 = vsyncadd %s181, %s190
          %s192 = sadd.s32 %s188, 4
          %s193 = smul.addr %s25, 8
          %s194 = sadd.s32 %s192, %s193
          %s195 = smul.addr %s194, 128
          %s196 = scalar_lea.hbm %s0, %s195
          %s198 = sshll.u32 %s184, 4
          %s199 = int_to_ptr.vmem [resolvable:$true] %s198
          %201 = dma.hbm_to_vmem [thread:$0]  %s196, 128, %s199, %s181
        $region20: #{tpu_custom_call.1} parent=15 // pred_fallthru
          _
        // Predicated region
        $region21: #{tpu_custom_call.1} parent=15 // pred_check
          %p202 = pneg %p88
        $region22: #{tpu_custom_call.1} parent=15 // pred_check_branch
          %204 = sbr.rel (%p202) target = $region24
        $region23: #{tpu_custom_call.1} parent=15 // pred_region
          %s205 = sand.u32 %s18, 1
          %s206 = scalar_lea.sflag [#allocation7], %s205
          %s207 = sand.u32 %s78, 1
          %s208 = smul.addr %s207, 16
          %s209 = scalar_lea.vmem [#allocation6], %s208
          %s210 = smul.u32 2, %s26
          %s212 = ssub.s32 256, 256
          %213 = vsyncadd %s206, %s212
          %s214 = sadd.s32 %s210, 4
          %s215 = smul.addr %s25, 8
          %s216 = sadd.s32 %s214, %s215
          %s217 = smul.addr %s216, 128
          %s218 = scalar_lea.hbm %s1, %s217
          %s219 = sshll.u32 %s209, 4
          %s220 = int_to_ptr.vmem [resolvable:$true] %s219
          %225 = dma.hbm_to_vmem [thread:$0]  %s218, 256, %s220, %s206, 128, 128, 8
        $region24: #{tpu_custom_call.1} parent=15 // pred_fallthru
          _
        // Predicated region
        $region25: #{tpu_custom_call.1} parent=15 // pred_check
          %p226 = pneg %p124
        $region26: #{tpu_custom_call.1} parent=15 // pred_check_branch
          %228 = sbr.rel (%p226) target = $region28
        $region27: #{tpu_custom_call.1} parent=15 // pred_region
          %s229 = sand.u32 %s18, 1
          %s230 = scalar_lea.sflag [#allocation7], %s229
          %s231 = sand.u32 %s114, 1
          %s232 = smul.addr %s231, 8
          %s233 = scalar_lea.vmem [#allocation8], %s232
          %s234 = sadd.s32 %s26, 1
          %s235 = smul.u32 %s234, 2
          %p236 = scmp.lt.s32.totalorder %s235, 1
          %s237 = scalar_select %p236, %s235, 1
          %s239 = ssub.s32 128, 128
          %240 = vsyncadd %s230, %s239
          %s241 = sadd.s32 %s237, 4
          %s242 = smul.addr %s25, 8
          %s243 = sadd.s32 %s241, %s242
          %s244 = smul.addr %s243, 128
          %s245 = scalar_lea.hbm %s2, %s244
          %s247 = sshll.u32 %s233, 4
          %s248 = int_to_ptr.vmem [resolvable:$true] %s247
          %250 = dma.hbm_to_vmem [thread:$0]  %s245, 128, %s248, %s230
        $region28: #{tpu_custom_call.1} parent=15 // pred_fallthru
          _
      $region16: #{tpu_custom_call.1} parent=5 // pred_fallthru
        _
      %p251 = scmp.le.s32.totalorder 1, %s18
      %p252 = scmp.lt.s32.totalorder %s18, 3
      %p253 = pnand %p251, %p252
      %p254 = pneg %p253
      // Predicated region
      $region29: #{tpu_custom_call.1} parent=5 // pred_check
        _
      $region30: #{tpu_custom_call.1} parent=5 // pred_check_branch
        %256 = sbr.rel (%p253) target = $region32
      $region31: #{tpu_custom_call.1} parent=5 // pred_region
        %s257 = ssub.s32 %s18, 1
        %s258 = sand.u32 %s53, 1
        %s259 = scalar_lea.sflag [#allocation4], %s258
        %s260 = sand.u32 %s53, 1
        %s261 = smul.addr %s260, 8
        %s262 = scalar_lea.vmem [#allocation3], %s261
        // Predicated region
        $region33: #{tpu_custom_call.1} parent=31 // pred_check
          %p263 = pneg %p66
        $region34: #{tpu_custom_call.1} parent=31 // pred_check_branch
          %265 = sbr.rel (%p263) target = $region36
        $region35: #{tpu_custom_call.1} parent=31 // pred_region
          %266 = dma.done %s259, 128
        $region36: #{tpu_custom_call.1} parent=31 // pred_fallthru
          _
        %s267 = sand.u32 %s23, 1
        %s268 = scalar_lea.sflag [#allocation7], %s267
        %s269 = sand.u32 %s81, 1
        %s270 = smul.addr %s269, 16
        %s271 = scalar_lea.vmem [#allocation6], %s270
        // Predicated region
        $region37: #{tpu_custom_call.1} parent=31 // pred_check
          %p272 = pneg %p94
        $region38: #{tpu_custom_call.1} parent=31 // pred_check_branch
          %274 = sbr.rel (%p272) target = $region40
        $region39: #{tpu_custom_call.1} parent=31 // pred_region
          %275 = dma.done %s268, 256
        $region40: #{tpu_custom_call.1} parent=31 // pred_fallthru
          _
        %s276 = sand.u32 %s23, 1
        %s277 = scalar_lea.sflag [#allocation7], %s276
        %s278 = sand.u32 %s117, 1
        %s279 = smul.addr %s278, 8
        %s280 = scalar_lea.vmem [#allocation8], %s279
        // Predicated region
        $region41: #{tpu_custom_call.1} parent=31 // pred_check
          %p281 = pneg %p130
        $region42: #{tpu_custom_call.1} parent=31 // pred_check_branch
          %283 = sbr.rel (%p281) target = $region44
        $region43: #{tpu_custom_call.1} parent=31 // pred_region
          %284 = dma.done %s277, 128
        $region44: #{tpu_custom_call.1} parent=31 // pred_fallthru
          _
        %s285 = sand.u32 %s53, 1
        %s286 = scalar_lea.sflag [#allocation4], %s285
        %s287 = sand.u32 %s53, 1
        %s288 = smul.addr %s287, 8
        %s289 = scalar_lea.vmem [#allocation3], %s288
        %p290 = pneg %p66
        %p291 = pneg %p63
        %s292 = sand.u32 %s23, 1
        %s293 = scalar_lea.sflag [#allocation7], %s292
        %s294 = sand.u32 %s81, 1
        %s295 = smul.addr %s294, 16
        %s296 = scalar_lea.vmem [#allocation6], %s295
        %p297 = pneg %p94
        %p298 = pneg %p91
        %s299 = sand.u32 %s23, 1
        %s300 = scalar_lea.sflag [#allocation7], %s299
        %s301 = sand.u32 %s117, 1
        %s302 = smul.addr %s301, 8
        %s303 = scalar_lea.vmem [#allocation8], %s302
        %p304 = pneg %p130
        %p305 = pneg %p127
        %p306 = pneg %p158
        %p307 = pneg %p155
        %s308 = sand.u32 %s145, 1
        %s309 = scalar_lea.sflag [#allocation5], %s308
        %s310 = sand.u32 %s145, 1
        %s311 = smul.addr %s310, 16
        %s312 = scalar_lea.vmem [#allocation9], %s311
        %s313 = smul.u32 %s28, 2
        %s314 = ssub.s32 %s313, 1
        %p315 = scmp.gt.s32.totalorder %s314, 0
        %s316 = scalar_select %p315, %s314, 0
        %s317 = smul.u32 2, %s28
        %s318 = sadd.s32 %s28, 1
        %s319 = smul.u32 %s318, 2
        %p320 = scmp.lt.s32.totalorder %s319, 1
        %s321 = scalar_select %p320, %s319, 1
        %s322 = smul.u32 2, %s28
        %p323 = scmp.eq.s32.totalorder %s28, 0
        %v324 = vld [vmem:[%s262 + $0x1] sm:$0x1]
        %v325 = vld [vmem:[%s262 + $0x7] sm:$0x1]
        %s326 = scalar_select %p323, 1, 0
        %v327 = vstv %s326
        %vm328 = vcmp.eq.s32.totalorder %v327, 1
        %v329 = vsel %vm328, %v324, %v325
        %v330 = vld [vmem:[%s280 + $0x6] sm:$0x1]
        %v331 = vld [vmem:[%s280] sm:$0x1]
        %v332 = vsel %vm328, %v330, %v331
        %v333 = vld [vmem:[%s271] sm:$0xff]
        %v334 = vld [vmem:[%s271 + $0x8] sm:$0xff]
        %vm335 = vcmask 130048
        %336 = vst.msk [vmem:[#allocation2 + $0x1] sm:$0xff] %vm335, %v333
        %337 = vst.msk [vmem:[#allocation2 + $0x9] sm:$0xff] %vm335, %v334
        %vm338 = vcmask 122880
        %339 = vst.msk [vmem:[#allocation2] sm:$0x1] %vm338, %v329
        %340 = vst.msk [vmem:[#allocation2 + $0x11] sm:$0x1] %vm338, %v332
        %v341 = vld [vmem:[#allocation2] sm:$0xff]
        %v342 = vld [vmem:[#allocation2 + $0x8] sm:$0x3]
        %345 = vrot.lane.b32.xlu0 %v341, 127
        %v346 = vpop.permute.xlu0 %345
        %347 = vrot.lane.b32.xlu0 %v342, 127
        %v348 = vpop.permute.xlu0 %347
        %351 = vrot.lane.b32.xlu0 %v341, 1
        %v352 = vpop.permute.xlu0 %351
        %353 = vrot.lane.b32.xlu0 %v342, 1
        %v354 = vpop.permute.xlu0 %353
        %vm357 = vcmask 7168
        %v358 = vsel %vm357, %v346, %v352
        %v359 = vsel %vm357, %v348, %v354
        %vm360 = vcmask 121856
        %v361 = vsel %vm360, %v346, %v352
        %v362 = vsel %vm360, %v348, %v354
        %v363 = vmin.f32 %v341, %v361
        %v364 = vmax.f32 %v341, %v361
        %v365 = vmin.f32 %v342, %v362
        %v366 = vmax.f32 %v342, %v362
        %v367 = vmin.f32 %v358, %v363
        %v368 = vmax.f32 %v358, %v363
        %v369 = vmin.f32 %v359, %v365
        %v370 = vmax.f32 %v359, %v365
        %v371 = vmin.f32 %v368, %v364
        %v372 = vmax.f32 %v368, %v364
        %v373 = vmin.f32 %v370, %v366
        %v374 = vmax.f32 %v370, %v366
        %vm377 = vcmask 1046528
        %v378 = vrot.slane %v367, 1
        %v379 = vrot.slane %v369, 1
        %v380 = vsel %vm377, %v378, %v379
        %v382 = vmax.f32 %v367, %v380
        %v385 = vrot.slane %v372, 1
        %v386 = vrot.slane %v374, 1
        %v387 = vsel %vm377, %v385, %v386
        %v390 = vmin.f32 %v372, %v387
        %v391 = vmin.f32 %v374, %v386
        %v394 = vrot.slane %v371, 1
        %v395 = vrot.slane %v373, 1
        %v396 = vsel %vm377, %v394, %v395
        %v399 = vmin.f32 %v371, %v396
        %v400 = vmin.f32 %v373, %v395
        %v401 = vmax.f32 %v371, %v396
        %v402 = vmax.f32 %v373, %v395
        %vm403 = vcmask 1045504
        %v404 = vrot.slane %v367, 2
        %v405 = vrot.slane %v369, 2
        %v406 = vsel %vm403, %v404, %v405
        %v408 = vmax.f32 %v382, %v406
        %v411 = vrot.slane %v399, 1
        %v412 = vrot.slane %v400, 1
        %v413 = vsel %vm377, %v411, %v412
        %v415 = vmax.f32 %v371, %v413
        %v418 = vrot.slane %v390, 1
        %v419 = vrot.slane %v391, 1
        %v420 = vsel %vm377, %v418, %v419
        %v422 = vmin.f32 %v372, %v420
        %v425 = vrot.slane %v401, 1
        %v426 = vrot.slane %v402, 1
        %v427 = vsel %vm377, %v425, %v426
        %v429 = vmin.f32 %v415, %v427
        %v430 = vmin.f32 %v429, %v422
        %v431 = vmax.f32 %v429, %v422
        %v432 = vmax.f32 %v408, %v430
        %v433 = vmin.f32 %v432, %v431
        %v434 = vsub.f32 %v358, %v433
        %v435 = vand.u32 2147483647, %v434
        %v436 = vsub.f32 %v341, %v433
        %v437 = vand.u32 2147483647, %v436
        %v438 = vsub.f32 %v361, %v433
        %v439 = vand.u32 2147483647, %v438
        %v441 = vrot.slane %v433, 7
        %v443 = vsub.f32 %v358, %v441
        %v444 = vsub.f32 %v359, %v441
        %v445 = vand.u32 2147483647, %v443
        %v446 = vand.u32 2147483647, %v444
        %v447 = vsub.f32 %v341, %v441
        %v448 = vsub.f32 %v342, %v441
        %v449 = vand.u32 2147483647, %v447
        %v450 = vand.u32 2147483647, %v448
        %v451 = vsub.f32 %v361, %v441
        %v452 = vsub.f32 %v362, %v441
        %v453 = vand.u32 2147483647, %v451
        %v454 = vand.u32 2147483647, %v452
        %v455 = vrot.slane %v433, 6
        %v457 = vsub.f32 %v358, %v455
        %v458 = vsub.f32 %v359, %v455
        %v459 = vand.u32 2147483647, %v457
        %v460 = vand.u32 2147483647, %v458
        %v461 = vsub.f32 %v341, %v455
        %v462 = vsub.f32 %v342, %v455
        %v463 = vand.u32 2147483647, %v461
        %v464 = vand.u32 2147483647, %v462
        %v465 = vsub.f32 %v361, %v455
        %v466 = vsub.f32 %v362, %v455
        %v467 = vand.u32 2147483647, %v465
        %v468 = vand.u32 2147483647, %v466
        %v469 = vmin.f32 %v437, %v439
        %v470 = vmax.f32 %v437, %v439
        %v471 = vmin.f32 %v449, %v453
        %v472 = vmin.f32 %v450, %v454
        %v473 = vmax.f32 %v449, %v453
        %v474 = vmax.f32 %v450, %v454
        %v475 = vmin.f32 %v463, %v467
        %v476 = vmin.f32 %v464, %v468
        %v477 = vmax.f32 %v463, %v467
        %v478 = vmax.f32 %v464, %v468
        %v479 = vmin.f32 %v435, %v469
        %v480 = vmax.f32 %v435, %v469
        %v481 = vmin.f32 %v445, %v471
        %v482 = vmin.f32 %v446, %v472
        %v483 = vmax.f32 %v445, %v471
        %v484 = vmax.f32 %v446, %v472
        %v485 = vmin.f32 %v459, %v475
        %v486 = vmin.f32 %v460, %v476
        %v487 = vmax.f32 %v459, %v475
        %v488 = vmax.f32 %v460, %v476
        %v489 = vmin.f32 %v480, %v470
        %v490 = vmax.f32 %v480, %v470
        %v491 = vmin.f32 %v483, %v473
        %v492 = vmin.f32 %v484, %v474
        %v493 = vmax.f32 %v483, %v473
        %v494 = vmax.f32 %v484, %v474
        %v495 = vmin.f32 %v487, %v477
        %v496 = vmin.f32 %v488, %v478
        %v497 = vmax.f32 %v487, %v477
        %v498 = vmax.f32 %v488, %v478
        %v501 = vrot.slane %v481, 1
        %v502 = vrot.slane %v482, 1
        %v503 = vsel %vm377, %v501, %v502
        %v505 = vmax.f32 %v479, %v503
        %v508 = vrot.slane %v497, 1
        %v509 = vrot.slane %v498, 1
        %v510 = vsel %vm377, %v508, %v509
        %v513 = vmin.f32 %v493, %v510
        %v514 = vmin.f32 %v494, %v509
        %v517 = vrot.slane %v495, 1
        %v518 = vrot.slane %v496, 1
        %v519 = vsel %vm377, %v517, %v518
        %v522 = vmin.f32 %v491, %v519
        %v523 = vmin.f32 %v492, %v518
        %v524 = vmax.f32 %v491, %v519
        %v525 = vmax.f32 %v492, %v518
        %v528 = vrot.slane %v485, 2
        %v529 = vrot.slane %v486, 2
        %v530 = vsel %vm403, %v528, %v529
        %v532 = vmax.f32 %v505, %v530
        %v535 = vrot.slane %v522, 1
        %v536 = vrot.slane %v523, 1
        %v537 = vsel %vm377, %v535, %v536
        %v539 = vmax.f32 %v489, %v537
        %v542 = vrot.slane %v513, 1
        %v543 = vrot.slane %v514, 1
        %v544 = vsel %vm377, %v542, %v543
        %v546 = vmin.f32 %v490, %v544
        %v549 = vrot.slane %v524, 1
        %v550 = vrot.slane %v525, 1
        %v551 = vsel %vm377, %v549, %v550
        %v553 = vmin.f32 %v539, %v551
        %v554 = vmin.f32 %v553, %v546
        %v555 = vmax.f32 %v553, %v546
        %v556 = vmax.f32 %v532, %v554
        %v557 = vmin.f32 %v556, %v555
        %558 = vst.msk [vmem:[%s312] sm:$0xff] %vm335, %v557
        %s559 = scalar_lea.vmem [#allocation2], 8
        %v560 = vld [vmem:[%s559] sm:$0xff]
        %v561 = vld [vmem:[%s559 + $0x8] sm:$0x3]
        %564 = vrot.lane.b32.xlu0 %v560, 127
        %v565 = vpop.permute.xlu0 %564
        %566 = vrot.lane.b32.xlu0 %v561, 127
        %v567 = vpop.permute.xlu0 %566
        %570 = vrot.lane.b32.xlu0 %v560, 1
        %v571 = vpop.permute.xlu0 %570
        %572 = vrot.lane.b32.xlu0 %v561, 1
        %v573 = vpop.permute.xlu0 %572
        %v576 = vsel %vm357, %v565, %v571
        %v577 = vsel %vm357, %v567, %v573
        %v578 = vsel %vm360, %v565, %v571
        %v579 = vsel %vm360, %v567, %v573
        %v580 = vmin.f32 %v560, %v578
        %v581 = vmax.f32 %v560, %v578
        %v582 = vmin.f32 %v561, %v579
        %v583 = vmax.f32 %v561, %v579
        %v584 = vmin.f32 %v576, %v580
        %v585 = vmax.f32 %v576, %v580
        %v586 = vmin.f32 %v577, %v582
        %v587 = vmax.f32 %v577, %v582
        %v588 = vmin.f32 %v585, %v581
        %v589 = vmax.f32 %v585, %v581
        %v590 = vmin.f32 %v587, %v583
        %v591 = vmax.f32 %v587, %v583
        %v594 = vrot.slane %v584, 1
        %v595 = vrot.slane %v586, 1
        %v596 = vsel %vm377, %v594, %v595
        %v598 = vmax.f32 %v584, %v596
        %v601 = vrot.slane %v589, 1
        %v602 = vrot.slane %v591, 1
        %v603 = vsel %vm377, %v601, %v602
        %v606 = vmin.f32 %v589, %v603
        %v607 = vmin.f32 %v591, %v602
        %v610 = vrot.slane %v588, 1
        %v611 = vrot.slane %v590, 1
        %v612 = vsel %vm377, %v610, %v611
        %v615 = vmin.f32 %v588, %v612
        %v616 = vmin.f32 %v590, %v611
        %v617 = vmax.f32 %v588, %v612
        %v618 = vmax.f32 %v590, %v611
        %v619 = vrot.slane %v584, 2
        %v620 = vrot.slane %v586, 2
        %v621 = vsel %vm403, %v619, %v620
        %v623 = vmax.f32 %v598, %v621
        %v626 = vrot.slane %v615, 1
        %v627 = vrot.slane %v616, 1
        %v628 = vsel %vm377, %v626, %v627
        %v630 = vmax.f32 %v588, %v628
        %v633 = vrot.slane %v606, 1
        %v634 = vrot.slane %v607, 1
        %v635 = vsel %vm377, %v633, %v634
        %v637 = vmin.f32 %v589, %v635
        %v640 = vrot.slane %v617, 1
        %v641 = vrot.slane %v618, 1
        %v642 = vsel %vm377, %v640, %v641
        %v644 = vmin.f32 %v630, %v642
        %v645 = vmin.f32 %v644, %v637
        %v646 = vmax.f32 %v644, %v637
        %v647 = vmax.f32 %v623, %v645
        %v648 = vmin.f32 %v647, %v646
        %v649 = vsub.f32 %v576, %v648
        %v650 = vand.u32 2147483647, %v649
        %v651 = vsub.f32 %v560, %v648
        %v652 = vand.u32 2147483647, %v651
        %v653 = vsub.f32 %v578, %v648
        %v654 = vand.u32 2147483647, %v653
        %v656 = vrot.slane %v648, 7
        %v658 = vsub.f32 %v576, %v656
        %v659 = vsub.f32 %v577, %v656
        %v660 = vand.u32 2147483647, %v658
        %v661 = vand.u32 2147483647, %v659
        %v662 = vsub.f32 %v560, %v656
        %v663 = vsub.f32 %v561, %v656
        %v664 = vand.u32 2147483647, %v662
        %v665 = vand.u32 2147483647, %v663
        %v666 = vsub.f32 %v578, %v656
        %v667 = vsub.f32 %v579, %v656
        %v668 = vand.u32 2147483647, %v666
        %v669 = vand.u32 2147483647, %v667
        %v670 = vrot.slane %v648, 6
        %v672 = vsub.f32 %v576, %v670
        %v673 = vsub.f32 %v577, %v670
        %v674 = vand.u32 2147483647, %v672
        %v675 = vand.u32 2147483647, %v673
        %v676 = vsub.f32 %v560, %v670
        %v677 = vsub.f32 %v561, %v670
        %v678 = vand.u32 2147483647, %v676
        %v679 = vand.u32 2147483647, %v677
        %v680 = vsub.f32 %v578, %v670
        %v681 = vsub.f32 %v579, %v670
        %v682 = vand.u32 2147483647, %v680
        %v683 = vand.u32 2147483647, %v681
        %v684 = vmin.f32 %v652, %v654
        %v685 = vmax.f32 %v652, %v654
        %v686 = vmin.f32 %v664, %v668
        %v687 = vmin.f32 %v665, %v669
        %v688 = vmax.f32 %v664, %v668
        %v689 = vmax.f32 %v665, %v669
        %v690 = vmin.f32 %v678, %v682
        %v691 = vmin.f32 %v679, %v683
        %v692 = vmax.f32 %v678, %v682
        %v693 = vmax.f32 %v679, %v683
        %v694 = vmin.f32 %v650, %v684
        %v695 = vmax.f32 %v650, %v684
        %v696 = vmin.f32 %v660, %v686
        %v697 = vmin.f32 %v661, %v687
        %v698 = vmax.f32 %v660, %v686
        %v699 = vmax.f32 %v661, %v687
        %v700 = vmin.f32 %v674, %v690
        %v701 = vmin.f32 %v675, %v691
        %v702 = vmax.f32 %v674, %v690
        %v703 = vmax.f32 %v675, %v691
        %v704 = vmin.f32 %v695, %v685
        %v705 = vmax.f32 %v695, %v685
        %v706 = vmin.f32 %v698, %v688
        %v707 = vmin.f32 %v699, %v689
        %v708 = vmax.f32 %v698, %v688
        %v709 = vmax.f32 %v699, %v689
        %v710 = vmin.f32 %v702, %v692
        %v711 = vmin.f32 %v703, %v693
        %v712 = vmax.f32 %v702, %v692
        %v713 = vmax.f32 %v703, %v693
        %v716 = vrot.slane %v696, 1
        %v717 = vrot.slane %v697, 1
        %v718 = vsel %vm377, %v716, %v717
        %v720 = vmax.f32 %v694, %v718
        %v723 = vrot.slane %v712, 1
        %v724 = vrot.slane %v713, 1
        %v725 = vsel %vm377, %v723, %v724
        %v728 = vmin.f32 %v708, %v725
        %v729 = vmin.f32 %v709, %v724
        %v732 = vrot.slane %v710, 1
        %v733 = vrot.slane %v711, 1
        %v734 = vsel %vm377, %v732, %v733
        %v737 = vmin.f32 %v706, %v734
        %v738 = vmin.f32 %v707, %v733
        %v739 = vmax.f32 %v706, %v734
        %v740 = vmax.f32 %v707, %v733
        %v743 = vrot.slane %v700, 2
        %v744 = vrot.slane %v701, 2
        %v745 = vsel %vm403, %v743, %v744
        %v747 = vmax.f32 %v720, %v745
        %v750 = vrot.slane %v737, 1
        %v751 = vrot.slane %v738, 1
        %v752 = vsel %vm377, %v750, %v751
        %v754 = vmax.f32 %v704, %v752
        %v757 = vrot.slane %v728, 1
        %v758 = vrot.slane %v729, 1
        %v759 = vsel %vm377, %v757, %v758
        %v761 = vmin.f32 %v705, %v759
        %v764 = vrot.slane %v739, 1
        %v765 = vrot.slane %v740, 1
        %v766 = vsel %vm377, %v764, %v765
        %v768 = vmin.f32 %v754, %v766
        %v769 = vmin.f32 %v768, %v761
        %v770 = vmax.f32 %v768, %v761
        %v771 = vmax.f32 %v747, %v769
        %v772 = vmin.f32 %v771, %v770
        %s773 = scalar_lea.vmem %s312, 8 [#allocation9]
        %774 = vst.msk [vmem:[%s773] sm:$0xff] %vm335, %v772
        %s775 = sand.u32 %s145, 1
        %s776 = scalar_lea.sflag [#allocation5], %s775
        %s777 = sand.u32 %s145, 1
        %s778 = smul.addr %s777, 16
        %s779 = scalar_lea.vmem [#allocation9], %s778
        // Predicated region
        $region45: #{tpu_custom_call.1} parent=31 // pred_check
          %p780 = pneg %p155
        $region46: #{tpu_custom_call.1} parent=31 // pred_check_branch
          %782 = sbr.rel (%p780) target = $region48
        $region47: #{tpu_custom_call.1} parent=31 // pred_region
          %s783 = smul.u32 2, %s28
          %s785 = ssub.s32 256, 256
          %786 = vsyncadd %s776, %s785
          %s787 = smul.addr %s27, 2
          %s788 = sadd.s32 %s783, %s787
          %s789 = smul.addr %s788, 128
          %s790 = scalar_lea.hbm %s3, %s789
          %s791 = sshll.u32 %s779, 4
          %s792 = int_to_ptr.vmem [resolvable:$true] %s791
          %797 = dma.vmem_to_hbm [thread:$0]  %s792, 256, %s790, %s776, 128, 128, 8
        $region48: #{tpu_custom_call.1} parent=31 // pred_fallthru
          _
      $region32: #{tpu_custom_call.1} parent=5 // pred_fallthru
        _
      %p798 = scmp.le.s32.totalorder 2, %s18
      // Predicated region
      $region49: #{tpu_custom_call.1} parent=5 // pred_check
        %p799 = pneg %p798
      $region50: #{tpu_custom_call.1} parent=5 // pred_check_branch
        %801 = sbr.rel (%p799) target = $region52
      $region51: #{tpu_custom_call.1} parent=5 // pred_region
        %s802 = ssub.s32 %s18, 2
        // Predicated region
        $region53: #{tpu_custom_call.1} parent=51 // pred_check
          %p803 = pneg %p161
        $region54: #{tpu_custom_call.1} parent=51 // pred_check_branch
          %805 = sbr.rel (%p803) target = $region56
        $region55: #{tpu_custom_call.1} parent=51 // pred_region
          %s806 = sand.u32 %s146, 1
          %s807 = scalar_lea.sflag [#allocation5], %s806
          %s808 = sand.u32 %s146, 1
          %s809 = smul.addr %s808, 16
          %s810 = scalar_lea.vmem [#allocation9], %s809
          %811 = dma.done %s807, 256
        $region56: #{tpu_custom_call.1} parent=51 // pred_fallthru
          _
      $region52: #{tpu_custom_call.1} parent=5 // pred_fallthru
        _
    $region6: #{tpu_custom_call.1} parent=1 // loop_footer
      %s22 = sadd.s32 1, %s18
    $region7: #{tpu_custom_call.1} parent=1 // loop_footer_branch
      %17 = sbr.rel target = $region3
    $region8: #{tpu_custom_call.1} parent=1 // loop_exit
      _
    %812 = vsyncpa [#allocation4], 1
    %s813 = scalar_lea.sflag [#allocation4], 1
    %814 = vsyncpa %s813, 1
    %815 = vsyncpa [#allocation7], 1
    %s816 = scalar_lea.sflag [#allocation7], 1
    %817 = vsyncpa %s816, 1
    %818 = vsyncpa [#allocation5], 1
    %s819 = scalar_lea.sflag [#allocation5], 1
    %820 = vsyncpa %s819, 1

</llo_original>
